<compile_context>
chip_gen: v5e
topology: v5e:2x2
jax: 0.10.0
libtpu: 0.0.40
codegen_flags: <defaults>
</compile_context>

<pallas_src>
import functools

import jax
import jax.numpy as jnp
from jax.experimental import pallas as pl
from jax.experimental.pallas import tpu as pltpu

LAYERS = (3, 64, 64, 2)


def _fcn_kernel(x_ref, w0_ref, b0_ref, w1_ref, b1_ref, w2_ref, b2_ref, o_ref):
    # x_ref: (3, tm) tile (batch on lanes).  Weights are full small arrays in
    # the torch (out, in) layout; biases are (out, 1) and broadcast over lanes.
    x = x_ref[...]                       # (3, tm) f32
    w0 = w0_ref[...]                     # (64, 3)

    # --- layer 0: Linear(3 -> 64) via 3 VPU broadcast multiply-adds + tanh ---
    z0 = (w0[:, 0:1] * x[0:1, :]
          + w0[:, 1:2] * x[1:2, :]
          + w0[:, 2:3] * x[2:3, :]
          + b0_ref[...])                 # (64, tm)
    a0 = jnp.tanh(z0)

    # --- layer 1: Linear(64 -> 64) on the MXU + tanh -------------------------
    z1 = jnp.dot(w1_ref[...], a0, preferred_element_type=jnp.float32) + b1_ref[...]
    a1 = jnp.tanh(z1)

    # --- layer 2: Linear(64 -> 2), no activation ------------------------------
    z2 = jnp.dot(w2_ref[...], a1, preferred_element_type=jnp.float32) + b2_ref[...]
    o_ref[...] = z2.astype(o_ref.dtype)  # (2, tm) lane-dense store


@functools.partial(jax.jit, static_argnames=("tm",))
def fcn_forward(xyt, params, *, tm=2048):
    """Forward pass of FCN.  xyt: (N, 3) float32 -> (N, 2) float32."""
    (w0, b0), (w1, b1), (w2, b2) = params
    # Normalize bias shapes to (out, 1) so they broadcast over lanes in-kernel.
    b0 = b0.reshape(LAYERS[1], 1)
    b1 = b1.reshape(LAYERS[2], 1)
    b2 = b2.reshape(LAYERS[3], 1)

    N = xyt.shape[0]
    assert tm % 128 == 0, "batch tile must be a multiple of the 128-lane width"

    # Shrink the tile for tiny batches, then pad the batch to a tile multiple
    # so arbitrary N works without forcing a small tile (padded columns are
    # computed and sliced off at the end).
    tm_eff = min(tm, pl.cdiv(N, 128) * 128)
    n_pad = pl.cdiv(N, tm_eff) * tm_eff

    # Batch-on-lanes layout: (N, 3) -> (3, n_pad), zero-padded on the right.
    x_t = jnp.zeros((LAYERS[0], n_pad), jnp.float32).at[:, :N].set(
        xyt.astype(jnp.float32).T)

    grid = (n_pad // tm_eff,)

    def full(shape):
        # Whole (small) array in VMEM every grid step, same block each time.
        return pl.BlockSpec(shape, lambda i, _s=shape: tuple(0 for _ in _s))

    flops = 2 * n_pad * (3 * 64 + 64 * 64 + 64 * 2)
    out_t = pl.pallas_call(
        _fcn_kernel,
        out_shape=jax.ShapeDtypeStruct((LAYERS[-1], n_pad), jnp.float32),
        grid_spec=pltpu.PrefetchScalarGridSpec(
            num_scalar_prefetch=0,
            grid=grid,
            in_specs=[
                pl.BlockSpec((LAYERS[0], tm_eff), lambda i: (0, i)),  # x tile
                full((LAYERS[1], LAYERS[0])),  # w0 (64, 3)
                full((LAYERS[1], 1)),          # b0 (64, 1)
                full((LAYERS[2], LAYERS[1])),  # w1 (64, 64)
                full((LAYERS[2], 1)),          # b1 (64, 1)
                full((LAYERS[3], LAYERS[2])),  # w2 (2, 64)
                full((LAYERS[3], 1)),          # b2 (2, 1)
            ],
            out_specs=pl.BlockSpec((LAYERS[-1], tm_eff), lambda i: (0, i)),
        ),
        compiler_params=pltpu.CompilerParams(
            dimension_semantics=("parallel",),
        ),
        cost_estimate=pl.CostEstimate(
            flops=flops,
            transcendentals=2 * 64 * n_pad,                       # two tanh layers
            bytes_accessed=(LAYERS[0] + LAYERS[-1]) * 4 * n_pad,  # x in, uv out
        ),
    )(x_t, w0, b0, w1, b1, w2, b2)

    return out_t[:, :N].T  # back to (N, 2) = [u, v]


def init_params(key):
    """Xavier-normal weights (torch (out, in) layout), zero biases."""
    params = []
    for i in range(len(LAYERS) - 1):
        key, sub = jax.random.split(key)
        fan_in, fan_out = LAYERS[i], LAYERS[i + 1]
        std = (2.0 / (fan_in + fan_out)) ** 0.5
        w = std * jax.random.normal(sub, (fan_out, fan_in), dtype=jnp.float32)
        b = jnp.zeros((fan_out, 1), dtype=jnp.float32)
        params.append((w, b))
    return tuple(params)


def fcn_forward_ref(xyt, params):
    """Plain-JAX reference for correctness checking."""
    (w0, b0), (w1, b1), (w2, b2) = params
    a = xyt.astype(jnp.float32)
    a = jnp.tanh(a @ w0.T + b0[:, 0])
    a = jnp.tanh(a @ w1.T + b1[:, 0])
    return a @ w2.T + b2[:, 0]


# TODO(synk): lossBC / lossPDE / loss (autograd-based PDE residual losses) are
# training-time utilities, not part of forward(); only forward() is kernelized.

if __name__ == "__main__":
    key = jax.random.PRNGKey(0)
    key, pkey, xkey = jax.random.split(key, 3)

    params = init_params(pkey)

    # Deliberately not a multiple of 128/tm to exercise the padding path.
    N = 200
    xyt = jax.random.uniform(xkey, (N, 3), dtype=jnp.float32)

    out = fcn_forward(xyt, params, tm=512)
    out = jax.block_until_ready(out)

    ref = fcn_forward_ref(xyt, params)
    assert out.shape == (N, 2)
    assert jnp.allclose(out, ref, atol=1e-4, rtol=1e-4), "mismatch vs reference"

    print("KERNEL_OK")
</pallas_src>

<mosaic_0001>
module attributes {stable_mosaic.version = 11 : i64} {
  func.func @_fcn_kernel(%arg0: i32, %arg1: memref<3x256xf32, #tpu.memory_space<vmem>>, %arg2: memref<64x3xf32, #tpu.memory_space<vmem>>, %arg3: memref<64x1xf32, #tpu.memory_space<vmem>>, %arg4: memref<64x64xf32, #tpu.memory_space<vmem>>, %arg5: memref<64x1xf32, #tpu.memory_space<vmem>>, %arg6: memref<2x64xf32, #tpu.memory_space<vmem>>, %arg7: memref<2x1xf32, #tpu.memory_space<vmem>>, %arg8: memref<2x256xf32, #tpu.memory_space<vmem>>) attributes {dimension_semantics = [#tpu.dimension_semantics<parallel>], iteration_bounds = array<i64: 1>, scalar_prefetch = 0 : i64, scratch_operands = 0 : i64, tpu.core_type = #tpu.core_type<tc>, window_params = [{transform_indices = @transform_0, window_bounds = array<i64: 3, 256>}, {pipeline_mode = #tpu.pipeline_mode<synchronous>, transform_indices = @transform_1, window_bounds = array<i64: 64, 3>}, {pipeline_mode = #tpu.pipeline_mode<synchronous>, transform_indices = @transform_2, window_bounds = array<i64: 64, 1>}, {pipeline_mode = #tpu.pipeline_mode<synchronous>, transform_indices = @transform_3, window_bounds = array<i64: 64, 64>}, {pipeline_mode = #tpu.pipeline_mode<synchronous>, transform_indices = @transform_4, window_bounds = array<i64: 64, 1>}, {pipeline_mode = #tpu.pipeline_mode<synchronous>, transform_indices = @transform_5, window_bounds = array<i64: 2, 64>}, {pipeline_mode = #tpu.pipeline_mode<synchronous>, transform_indices = @transform_6, window_bounds = array<i64: 2, 1>}, {transform_indices = @transform_7, window_bounds = array<i64: 2, 256>}]} {
    %c0 = arith.constant 0 : index
    %c0_0 = arith.constant 0 : index
    %0 = vector.load %arg1[%c0, %c0_0] : memref<3x256xf32, #tpu.memory_space<vmem>>, vector<3x256xf32>
    %c0_1 = arith.constant 0 : index
    %c0_2 = arith.constant 0 : index
    %1 = vector.load %arg2[%c0_1, %c0_2] : memref<64x3xf32, #tpu.memory_space<vmem>>, vector<64x3xf32>
    %2 = vector.extract_strided_slice %1 {offsets = [0, 0], sizes = [64, 1], strides = [1, 1]} : vector<64x3xf32> to vector<64x1xf32>
    %3 = vector.extract_strided_slice %0 {offsets = [0, 0], sizes = [1, 256], strides = [1, 1]} : vector<3x256xf32> to vector<1x256xf32>
    %4 = vector.broadcast %2 : vector<64x1xf32> to vector<64x256xf32>
    %5 = vector.broadcast %3 : vector<1x256xf32> to vector<64x256xf32>
    %6 = arith.mulf %4, %5 : vector<64x256xf32>
    %7 = vector.extract_strided_slice %1 {offsets = [0, 1], sizes = [64, 1], strides = [1, 1]} : vector<64x3xf32> to vector<64x1xf32>
    %8 = vector.extract_strided_slice %0 {offsets = [1, 0], sizes = [1, 256], strides = [1, 1]} : vector<3x256xf32> to vector<1x256xf32>
    %9 = vector.broadcast %7 : vector<64x1xf32> to vector<64x256xf32>
    %10 = vector.broadcast %8 : vector<1x256xf32> to vector<64x256xf32>
    %11 = arith.mulf %9, %10 : vector<64x256xf32>
    %12 = arith.addf %6, %11 : vector<64x256xf32>
    %13 = vector.extract_strided_slice %1 {offsets = [0, 2], sizes = [64, 1], strides = [1, 1]} : vector<64x3xf32> to vector<64x1xf32>
    %14 = vector.extract_strided_slice %0 {offsets = [2, 0], sizes = [1, 256], strides = [1, 1]} : vector<3x256xf32> to vector<1x256xf32>
    %15 = vector.broadcast %13 : vector<64x1xf32> to vector<64x256xf32>
    %16 = vector.broadcast %14 : vector<1x256xf32> to vector<64x256xf32>
    %17 = arith.mulf %15, %16 : vector<64x256xf32>
    %18 = arith.addf %12, %17 : vector<64x256xf32>
    %c0_3 = arith.constant 0 : index
    %c0_4 = arith.constant 0 : index
    %19 = vector.load %arg3[%c0_3, %c0_4] : memref<64x1xf32, #tpu.memory_space<vmem>>, vector<64x1xf32>
    %20 = vector.broadcast %19 : vector<64x1xf32> to vector<64x256xf32>
    %21 = arith.addf %18, %20 : vector<64x256xf32>
    %22 = math.tanh %21 : vector<64x256xf32>
    %c0_5 = arith.constant 0 : index
    %c0_6 = arith.constant 0 : index
    %23 = vector.load %arg4[%c0_5, %c0_6] : memref<64x64xf32, #tpu.memory_space<vmem>>, vector<64x64xf32>
    %cst = arith.constant dense<0.000000e+00> : vector<64x256xf32>
    %24 = tpu.matmul %23, %22, %cst {dimension_numbers = #tpu.dot_dimension_numbers<[1], [0], [0], [1], [0, 0, 1, 1], [], []>} : vector<64x64xf32>, vector<64x256xf32>, vector<64x256xf32> -> vector<64x256xf32>
    %c0_7 = arith.constant 0 : index
    %c0_8 = arith.constant 0 : index
    %25 = vector.load %arg5[%c0_7, %c0_8] : memref<64x1xf32, #tpu.memory_space<vmem>>, vector<64x1xf32>
    %26 = vector.broadcast %25 : vector<64x1xf32> to vector<64x256xf32>
    %27 = arith.addf %24, %26 : vector<64x256xf32>
    %28 = math.tanh %27 : vector<64x256xf32>
    %c0_9 = arith.constant 0 : index
    %c0_10 = arith.constant 0 : index
    %29 = vector.load %arg6[%c0_9, %c0_10] : memref<2x64xf32, #tpu.memory_space<vmem>>, vector<2x64xf32>
    %cst_11 = arith.constant dense<0.000000e+00> : vector<2x256xf32>
    %30 = tpu.matmul %29, %28, %cst_11 {dimension_numbers = #tpu.dot_dimension_numbers<[1], [0], [0], [1], [0, 0, 1, 1], [], []>} : vector<2x64xf32>, vector<64x256xf32>, vector<2x256xf32> -> vector<2x256xf32>
    %c0_12 = arith.constant 0 : index
    %c0_13 = arith.constant 0 : index
    %31 = vector.load %arg7[%c0_12, %c0_13] : memref<2x1xf32, #tpu.memory_space<vmem>>, vector<2x1xf32>
    %32 = vector.broadcast %31 : vector<2x1xf32> to vector<2x256xf32>
    %33 = arith.addf %30, %32 : vector<2x256xf32>
    %c0_14 = arith.constant 0 : index
    %c0_15 = arith.constant 0 : index
    %34 = vector.load %arg8[%c0_14, %c0_15] : memref<2x256xf32, #tpu.memory_space<vmem>>, vector<2x256xf32>
    tpu.vector_store %arg8[%c0_14, %c0_15], %33 {strides = array<i32>} : memref<2x256xf32, #tpu.memory_space<vmem>>, vector<2x256xf32>,
    return
  }
  func.func @transform_0(%arg0: i32) -> (i32, i32) {
    %c0_i32 = arith.constant 0 : i32
    %c0_i32_0 = arith.constant 0 : i32
    return %c0_i32, %arg0 : i32, i32
  }
  func.func @transform_1(%arg0: i32) -> (i32, i32) {
    %c0_i32 = arith.constant 0 : i32
    %c0_i32_0 = arith.constant 0 : i32
    %c0_i32_1 = arith.constant 0 : i32
    return %c0_i32, %c0_i32_0 : i32, i32
  }
  func.func @transform_2(%arg0: i32) -> (i32, i32) {
    %c0_i32 = arith.constant 0 : i32
    %c0_i32_0 = arith.constant 0 : i32
    %c0_i32_1 = arith.constant 0 : i32
    return %c0_i32, %c0_i32_0 : i32, i32
  }
  func.func @transform_3(%arg0: i32) -> (i32, i32) {
    %c0_i32 = arith.constant 0 : i32
    %c0_i32_0 = arith.constant 0 : i32
    %c0_i32_1 = arith.constant 0 : i32
    return %c0_i32, %c0_i32_0 : i32, i32
  }
  func.func @transform_4(%arg0: i32) -> (i32, i32) {
    %c0_i32 = arith.constant 0 : i32
    %c0_i32_0 = arith.constant 0 : i32
    %c0_i32_1 = arith.constant 0 : i32
    return %c0_i32, %c0_i32_0 : i32, i32
  }
  func.func @transform_5(%arg0: i32) -> (i32, i32) {
    %c0_i32 = arith.constant 0 : i32
    %c0_i32_0 = arith.constant 0 : i32
    %c0_i32_1 = arith.constant 0 : i32
    return %c0_i32, %c0_i32_0 : i32, i32
  }
  func.func @transform_6(%arg0: i32) -> (i32, i32) {
    %c0_i32 = arith.constant 0 : i32
    %c0_i32_0 = arith.constant 0 : i32
    %c0_i32_1 = arith.constant 0 : i32
    return %c0_i32, %c0_i32_0 : i32, i32
  }
  func.func @transform_7(%arg0: i32) -> (i32, i32) {
    %c0_i32 = arith.constant 0 : i32
    %c0_i32_0 = arith.constant 0 : i32
    return %c0_i32, %arg0 : i32, i32
  }
}

</mosaic_0001>

<llo_original>
// kernel: fcn_forward.1
$region0: #{fcn_forward.1}
  #allocation0 [shape = 'u32[]', space=smem, size = 0x4, offset = 0x4, fixed_abs, tag = 'smem constant byte address 0x4 - core index']
  #allocation1 [shape = 'u32[72,128]{1,0:T(1,128)}', space=vmem, size = 0x9000, scoped, tag = 'internal scratch']
  %s0 = inlined_call_operand.vmem [shape: f32[3,256], index: 0, kind: input, shape index: {}]
  %s1 = inlined_call_operand.vmem [shape: f32[64,3], index: 1, kind: input, shape index: {}]
  %s2 = inlined_call_operand.vmem [shape: f32[64,1], index: 2, kind: input, shape index: {}]
  %s3 = inlined_call_operand.vmem [shape: f32[64,64], index: 3, kind: input, shape index: {}]
  %s4 = inlined_call_operand.vmem [shape: f32[64,1], index: 4, kind: input, shape index: {}]
  %s5 = inlined_call_operand.vmem [shape: f32[2,64], index: 5, kind: input, shape index: {}]
  %s6 = inlined_call_operand.vmem [shape: f32[2,1], index: 6, kind: input, shape index: {}]
  %s7 = inlined_call_operand.vmem [shape: f32[2,256], index: 7, kind: output, shape index: {}]
  %s8 = sld [smem:[#allocation0]]
  $region38: #{fcn_forward.1} parent=0
    _
  %s10 = ssub.s32 1, %s8
  %s11 = scalar_select 0, %s10, %s8
  // Predicated region
  $region2: #{fcn_forward.1} parent=0 // pred_check
    _
  $region3: #{fcn_forward.1} parent=0 // pred_check_branch
    %13 = sbr.rel (0) target = $region5
  $region4: #{fcn_forward.1} parent=0 // pred_region
    _
  $region5: #{fcn_forward.1} parent=0 // pred_fallthru
    _
  // Predicated region
  $region6: #{fcn_forward.1} parent=0 // pred_check
    _
  $region7: #{fcn_forward.1} parent=0 // pred_check_branch
    %15 = sbr.rel (0) target = $region9
  $region8: #{fcn_forward.1} parent=0 // pred_region
    _
  $region9: #{fcn_forward.1} parent=0 // pred_fallthru
    _
  // Predicated region
  $region10: #{fcn_forward.1} parent=0 // pred_check
    _
  $region11: #{fcn_forward.1} parent=0 // pred_check_branch
    %17 = sbr.rel (0) target = $region13
  $region12: #{fcn_forward.1} parent=0 // pred_region
    _
  $region13: #{fcn_forward.1} parent=0 // pred_fallthru
    _
  // Predicated region
  $region14: #{fcn_forward.1} parent=0 // pred_check
    _
  $region15: #{fcn_forward.1} parent=0 // pred_check_branch
    %19 = sbr.rel (0) target = $region17
  $region16: #{fcn_forward.1} parent=0 // pred_region
    _
  $region17: #{fcn_forward.1} parent=0 // pred_fallthru
    _
  // Predicated region
  $region18: #{fcn_forward.1} parent=0 // pred_check
    _
  $region19: #{fcn_forward.1} parent=0 // pred_check_branch
    %21 = sbr.rel (0) target = $region21
  $region20: #{fcn_forward.1} parent=0 // pred_region
    _
  $region21: #{fcn_forward.1} parent=0 // pred_fallthru
    _
  // Predicated region
  $region22: #{fcn_forward.1} parent=0 // pred_check
    _
  $region23: #{fcn_forward.1} parent=0 // pred_check_branch
    %23 = sbr.rel (0) target = $region25
  $region24: #{fcn_forward.1} parent=0 // pred_region
    _
  $region25: #{fcn_forward.1} parent=0 // pred_fallthru
    _
  // Predicated region
  $region26: #{fcn_forward.1} parent=0 // pred_check
    _
  $region27: #{fcn_forward.1} parent=0 // pred_check_branch
    %25 = sbr.rel (0) target = $region29
  $region28: #{fcn_forward.1} parent=0 // pred_region
    _
  $region29: #{fcn_forward.1} parent=0 // pred_fallthru
    _
  %v26 = vld [vmem:[%s0] sm:$0x77]
  %v27 = vld [vmem:[%s1] sm:$0xff]
  %v28 = vld [vmem:[%s1 + $0x8] sm:$0xff]
  %v29 = vld [vmem:[%s1 + $0x10] sm:$0xff]
  %v30 = vld [vmem:[%s1 + $0x18] sm:$0xff]
  %v31 = vld [vmem:[%s1 + $0x20] sm:$0xff]
  %v32 = vld [vmem:[%s1 + $0x28] sm:$0xff]
  %v33 = vld [vmem:[%s1 + $0x30] sm:$0xff]
  %v34 = vld [vmem:[%s1 + $0x38] sm:$0xff]
  %36 = vset.pattern.permute.xlu0 0
  %37 = vperm.xlu0 %36, %v27
  %v38 = vpop.permute.xlu0 %37
  %41 = vset.pattern.permute.xlu0 0
  %42 = vperm.xlu0 %41, %v28
  %v43 = vpop.permute.xlu0 %42
  %46 = vset.pattern.permute.xlu0 0
  %47 = vperm.xlu0 %46, %v29
  %v48 = vpop.permute.xlu0 %47
  %51 = vset.pattern.permute.xlu0 0
  %52 = vperm.xlu0 %51, %v30
  %v53 = vpop.permute.xlu0 %52
  %56 = vset.pattern.permute.xlu0 0
  %57 = vperm.xlu0 %56, %v31
  %v58 = vpop.permute.xlu0 %57
  %61 = vset.pattern.permute.xlu0 0
  %62 = vperm.xlu0 %61, %v32
  %v63 = vpop.permute.xlu0 %62
  %66 = vset.pattern.permute.xlu0 0
  %67 = vperm.xlu0 %66, %v33
  %v68 = vpop.permute.xlu0 %67
  %71 = vset.pattern.permute.xlu0 0
  %72 = vperm.xlu0 %71, %v34
  %v73 = vpop.permute.xlu0 %72
  %v76 = vperm.slane %v26, 0
  %v77 = vperm.slane %v26, 4
  %v80 = vperm.slane %v76, 0
  %v81 = vperm.slane %v77, 0
  %v82 = vmul.f32 %v38, %v80
  %v83 = vmul.f32 %v38, %v81
  %v84 = vmul.f32 %v43, %v80
  %v85 = vmul.f32 %v43, %v81
  %v86 = vmul.f32 %v48, %v80
  %v87 = vmul.f32 %v48, %v81
  %v88 = vmul.f32 %v53, %v80
  %v89 = vmul.f32 %v53, %v81
  %v90 = vmul.f32 %v58, %v80
  %v91 = vmul.f32 %v58, %v81
  %v92 = vmul.f32 %v63, %v80
  %v93 = vmul.f32 %v63, %v81
  %v94 = vmul.f32 %v68, %v80
  %v95 = vmul.f32 %v68, %v81
  %v96 = vmul.f32 %v73, %v80
  %v97 = vmul.f32 %v73, %v81
  %98 = vset.pattern.permute.xlu0 1
  %99 = vperm.xlu0 %98, %v27
  %v100 = vpop.permute.xlu0 %99
  %102 = vset.pattern.permute.xlu0 1
  %103 = vperm.xlu0 %102, %v28
  %v104 = vpop.permute.xlu0 %103
  %106 = vset.pattern.permute.xlu0 1
  %107 = vperm.xlu0 %106, %v29
  %v108 = vpop.permute.xlu0 %107
  %110 = vset.pattern.permute.xlu0 1
  %111 = vperm.xlu0 %110, %v30
  %v112 = vpop.permute.xlu0 %111
  %114 = vset.pattern.permute.xlu0 1
  %115 = vperm.xlu0 %114, %v31
  %v116 = vpop.permute.xlu0 %115
  %118 = vset.pattern.permute.xlu0 1
  %119 = vperm.xlu0 %118, %v32
  %v120 = vpop.permute.xlu0 %119
  %122 = vset.pattern.permute.xlu0 1
  %123 = vperm.xlu0 %122, %v33
  %v124 = vpop.permute.xlu0 %123
  %126 = vset.pattern.permute.xlu0 1
  %127 = vperm.xlu0 %126, %v34
  %v128 = vpop.permute.xlu0 %127
  %v130 = vperm.slane %v26, 1
  %v131 = vperm.slane %v26, 5
  %v134 = vperm.slane %v130, 1
  %v135 = vperm.slane %v131, 1
  %v136 = vmul.f32 %v100, %v134
  %v137 = vmul.f32 %v100, %v135
  %v138 = vmul.f32 %v104, %v134
  %v139 = vmul.f32 %v104, %v135
  %v140 = vmul.f32 %v108, %v134
  %v141 = vmul.f32 %v108, %v135
  %v142 = vmul.f32 %v112, %v134
  %v143 = vmul.f32 %v112, %v135
  %v144 = vmul.f32 %v116, %v134
  %v145 = vmul.f32 %v116, %v135
  %v146 = vmul.f32 %v120, %v134
  %v147 = vmul.f32 %v120, %v135
  %v148 = vmul.f32 %v124, %v134
  %v149 = vmul.f32 %v124, %v135
  %v150 = vmul.f32 %v128, %v134
  %v151 = vmul.f32 %v128, %v135
  %v152 = vadd.f32 %v82, %v136
  %v153 = vadd.f32 %v83, %v137
  %v154 = vadd.f32 %v84, %v138
  %v155 = vadd.f32 %v85, %v139
  %v156 = vadd.f32 %v86, %v140
  %v157 = vadd.f32 %v87, %v141
  %v158 = vadd.f32 %v88, %v142
  %v159 = vadd.f32 %v89, %v143
  %v160 = vadd.f32 %v90, %v144
  %v161 = vadd.f32 %v91, %v145
  %v162 = vadd.f32 %v92, %v146
  %v163 = vadd.f32 %v93, %v147
  %v164 = vadd.f32 %v94, %v148
  %v165 = vadd.f32 %v95, %v149
  %v166 = vadd.f32 %v96, %v150
  %v167 = vadd.f32 %v97, %v151
  %168 = vset.pattern.permute.xlu0 2
  %169 = vperm.xlu0 %168, %v27
  %v170 = vpop.permute.xlu0 %169
  %172 = vset.pattern.permute.xlu0 2
  %173 = vperm.xlu0 %172, %v28
  %v174 = vpop.permute.xlu0 %173
  %176 = vset.pattern.permute.xlu0 2
  %177 = vperm.xlu0 %176, %v29
  %v178 = vpop.permute.xlu0 %177
  %180 = vset.pattern.permute.xlu0 2
  %181 = vperm.xlu0 %180, %v30
  %v182 = vpop.permute.xlu0 %181
  %184 = vset.pattern.permute.xlu0 2
  %185 = vperm.xlu0 %184, %v31
  %v186 = vpop.permute.xlu0 %185
  %188 = vset.pattern.permute.xlu0 2
  %189 = vperm.xlu0 %188, %v32
  %v190 = vpop.permute.xlu0 %189
  %192 = vset.pattern.permute.xlu0 2
  %193 = vperm.xlu0 %192, %v33
  %v194 = vpop.permute.xlu0 %193
  %196 = vset.pattern.permute.xlu0 2
  %197 = vperm.xlu0 %196, %v34
  %v198 = vpop.permute.xlu0 %197
  %v200 = vperm.slane %v26, 2
  %v201 = vperm.slane %v26, 6
  %v204 = vperm.slane %v200, 2
  %v205 = vperm.slane %v201, 2
  %v206 = vmul.f32 %v170, %v204
  %v207 = vmul.f32 %v170, %v205
  %v208 = vmul.f32 %v174, %v204
  %v209 = vmul.f32 %v174, %v205
  %v210 = vmul.f32 %v178, %v204
  %v211 = vmul.f32 %v178, %v205
  %v212 = vmul.f32 %v182, %v204
  %v213 = vmul.f32 %v182, %v205
  %v214 = vmul.f32 %v186, %v204
  %v215 = vmul.f32 %v186, %v205
  %v216 = vmul.f32 %v190, %v204
  %v217 = vmul.f32 %v190, %v205
  %v218 = vmul.f32 %v194, %v204
  %v219 = vmul.f32 %v194, %v205
  %v220 = vmul.f32 %v198, %v204
  %v221 = vmul.f32 %v198, %v205
  %v222 = vadd.f32 %v152, %v206
  %v223 = vadd.f32 %v153, %v207
  %v224 = vadd.f32 %v154, %v208
  %v225 = vadd.f32 %v155, %v209
  %v226 = vadd.f32 %v156, %v210
  %v227 = vadd.f32 %v157, %v211
  %v228 = vadd.f32 %v158, %v212
  %v229 = vadd.f32 %v159, %v213
  %v230 = vadd.f32 %v160, %v214
  %v231 = vadd.f32 %v161, %v215
  %v232 = vadd.f32 %v162, %v216
  %v233 = vadd.f32 %v163, %v217
  %v234 = vadd.f32 %v164, %v218
  %v235 = vadd.f32 %v165, %v219
  %v236 = vadd.f32 %v166, %v220
  %v237 = vadd.f32 %v167, %v221
  %v238 = vld [vmem:[%s2] sm:$0xff]
  %v239 = vld [vmem:[%s2 + $0x8] sm:$0xff]
  %v240 = vld [vmem:[%s2 + $0x10] sm:$0xff]
  %v241 = vld [vmem:[%s2 + $0x18] sm:$0xff]
  %v242 = vld [vmem:[%s2 + $0x20] sm:$0xff]
  %v243 = vld [vmem:[%s2 + $0x28] sm:$0xff]
  %v244 = vld [vmem:[%s2 + $0x30] sm:$0xff]
  %v245 = vld [vmem:[%s2 + $0x38] sm:$0xff]
  %247 = vset.pattern.permute.xlu0 0
  %248 = vperm.xlu0 %247, %v238
  %v249 = vpop.permute.xlu0 %248
  %252 = vset.pattern.permute.xlu0 0
  %253 = vperm.xlu0 %252, %v239
  %v254 = vpop.permute.xlu0 %253
  %257 = vset.pattern.permute.xlu0 0
  %258 = vperm.xlu0 %257, %v240
  %v259 = vpop.permute.xlu0 %258
  %262 = vset.pattern.permute.xlu0 0
  %263 = vperm.xlu0 %262, %v241
  %v264 = vpop.permute.xlu0 %263
  %267 = vset.pattern.permute.xlu0 0
  %268 = vperm.xlu0 %267, %v242
  %v269 = vpop.permute.xlu0 %268
  %272 = vset.pattern.permute.xlu0 0
  %273 = vperm.xlu0 %272, %v243
  %v274 = vpop.permute.xlu0 %273
  %277 = vset.pattern.permute.xlu0 0
  %278 = vperm.xlu0 %277, %v244
  %v279 = vpop.permute.xlu0 %278
  %282 = vset.pattern.permute.xlu0 0
  %283 = vperm.xlu0 %282, %v245
  %v284 = vpop.permute.xlu0 %283
  %v286 = vadd.f32 %v222, %v249
  %v287 = vadd.f32 %v223, %v249
  %v288 = vadd.f32 %v224, %v254
  %v289 = vadd.f32 %v225, %v254
  %v290 = vadd.f32 %v226, %v259
  %v291 = vadd.f32 %v227, %v259
  %v292 = vadd.f32 %v228, %v264
  %v293 = vadd.f32 %v229, %v264
  %v294 = vadd.f32 %v230, %v269
  %v295 = vadd.f32 %v231, %v269
  %v296 = vadd.f32 %v232, %v274
  %v297 = vadd.f32 %v233, %v274
  %v298 = vadd.f32 %v234, %v279
  %v299 = vadd.f32 %v235, %v279
  %v300 = vadd.f32 %v236, %v284
  %v301 = vadd.f32 %v237, %v284
  %v302 = vtanh.pop %v286
  %v303 = vtanh.pop %v287
  %v304 = vtanh.pop %v288
  %v305 = vtanh.pop %v289
  %v306 = vtanh.pop %v290
  %v307 = vtanh.pop %v291
  %v308 = vtanh.pop %v292
  %v309 = vtanh.pop %v293
  %v310 = vtanh.pop %v294
  %v311 = vtanh.pop %v295
  %v312 = vtanh.pop %v296
  %v313 = vtanh.pop %v297
  %v314 = vtanh.pop %v298
  %v315 = vtanh.pop %v299
  %v316 = vtanh.pop %v300
  %v317 = vtanh.pop %v301
  %v318 = vld [vmem:[%s3] sm:$0xff]
  %v319 = vld [vmem:[%s3 + $0x8] sm:$0xff]
  %v320 = vld [vmem:[%s3 + $0x10] sm:$0xff]
  %v321 = vld [vmem:[%s3 + $0x18] sm:$0xff]
  %v322 = vld [vmem:[%s3 + $0x20] sm:$0xff]
  %v323 = vld [vmem:[%s3 + $0x28] sm:$0xff]
  %v324 = vld [vmem:[%s3 + $0x30] sm:$0xff]
  %v325 = vld [vmem:[%s3 + $0x38] sm:$0xff]
  %v326 = vld [vmem:[%s4] sm:$0xff]
  %v327 = vld [vmem:[%s4 + $0x8] sm:$0xff]
  %v328 = vld [vmem:[%s4 + $0x10] sm:$0xff]
  %v329 = vld [vmem:[%s4 + $0x18] sm:$0xff]
  %v330 = vld [vmem:[%s4 + $0x20] sm:$0xff]
  %v331 = vld [vmem:[%s4 + $0x28] sm:$0xff]
  %v332 = vld [vmem:[%s4 + $0x30] sm:$0xff]
  %v333 = vld [vmem:[%s4 + $0x38] sm:$0xff]
  %335 = vset.pattern.permute.xlu0 0
  %336 = vperm.xlu0 %335, %v326
  %v337 = vpop.permute.xlu0 %336
  %340 = vset.pattern.permute.xlu0 0
  %341 = vperm.xlu0 %340, %v327
  %v342 = vpop.permute.xlu0 %341
  %345 = vset.pattern.permute.xlu0 0
  %346 = vperm.xlu0 %345, %v328
  %v347 = vpop.permute.xlu0 %346
  %350 = vset.pattern.permute.xlu0 0
  %351 = vperm.xlu0 %350, %v329
  %v352 = vpop.permute.xlu0 %351
  %355 = vset.pattern.permute.xlu0 0
  %356 = vperm.xlu0 %355, %v330
  %v357 = vpop.permute.xlu0 %356
  %360 = vset.pattern.permute.xlu0 0
  %361 = vperm.xlu0 %360, %v331
  %v362 = vpop.permute.xlu0 %361
  %365 = vset.pattern.permute.xlu0 0
  %366 = vperm.xlu0 %365, %v332
  %v367 = vpop.permute.xlu0 %366
  %370 = vset.pattern.permute.xlu0 0
  %371 = vperm.xlu0 %370, %v333
  %v372 = vpop.permute.xlu0 %371
  %vm374 = vcmask 523264
  %v376 = vsel %vm374, %v318, 0
  %v379 = vsel %vm374, %v319, 0
  %v382 = vsel %vm374, %v320, 0
  %v385 = vsel %vm374, %v321, 0
  %v388 = vsel %vm374, %v322, 0
  %v391 = vsel %vm374, %v323, 0
  %v394 = vsel %vm374, %v324, 0
  %v397 = vsel %vm374, %v325, 0
  %399 = vmatpush.msra.mxu0 0.0
  %400 = vmatpush.msra.mxu0 0.0
  %401 = vmatpush.msra.mxu0 0.0
  %402 = vmatpush.msra.mxu0 0.0
  %403 = vmatpush.msra.mxu0 0.0
  %404 = vmatpush.msra.mxu0 0.0
  %405 = vmatpush.msra.mxu0 0.0
  %406 = vmatpush.msra.mxu0 0.0
  %407 = vmatpush.msra.mxu0 %v316
  %408 = vmatpush.msra.mxu0 %v314
  %409 = vmatpush.msra.mxu0 %v312
  %410 = vmatpush.msra.mxu0 %v310
  %411 = vmatpush.msra.mxu0 %v308
  %412 = vmatpush.msra.mxu0 %v306
  %413 = vmatpush.msra.mxu0 %v304
  %414 = vmatpush.msra.mxu0 %v302
  %415 = vmatmul.f32.gmra.mxu0 %v376
  %v416 = vpop.f32.mrf.mxu0
  %v417 = vadd.f32 %v337, %v416
  %418 = vmatmul.f32.gmra.mxu0 %v379
  %v419 = vpop.f32.mrf.mxu0
  %v420 = vadd.f32 %v342, %v419
  %421 = vmatmul.f32.gmra.mxu0 %v382
  %v422 = vpop.f32.mrf.mxu0
  %v423 = vadd.f32 %v347, %v422
  %424 = vmatmul.f32.gmra.mxu0 %v385
  %v425 = vpop.f32.mrf.mxu0
  %v426 = vadd.f32 %v352, %v425
  %427 = vmatmul.f32.gmra.mxu0 %v388
  %v428 = vpop.f32.mrf.mxu0
  %v429 = vadd.f32 %v357, %v428
  %430 = vmatmul.f32.gmra.mxu0 %v391
  %v431 = vpop.f32.mrf.mxu0
  %v432 = vadd.f32 %v362, %v431
  %433 = vmatmul.f32.gmra.mxu0 %v394
  %v434 = vpop.f32.mrf.mxu0
  %v435 = vadd.f32 %v367, %v434
  %436 = vmatmul.f32.gmra.mxu0 %v397
  %v437 = vpop.f32.mrf.mxu0
  %v438 = vadd.f32 %v372, %v437
  %439 = vdwg.mxu0
  %440 = vmatpush.msra.mxu0 0.0
  %441 = vmatpush.msra.mxu0 0.0
  %442 = vmatpush.msra.mxu0 0.0
  %443 = vmatpush.msra.mxu0 0.0
  %444 = vmatpush.msra.mxu0 0.0
  %445 = vmatpush.msra.mxu0 0.0
  %446 = vmatpush.msra.mxu0 0.0
  %447 = vmatpush.msra.mxu0 0.0
  %448 = vmatpush.msra.mxu0 %v317
  %449 = vmatpush.msra.mxu0 %v315
  %450 = vmatpush.msra.mxu0 %v313
  %451 = vmatpush.msra.mxu0 %v311
  %452 = vmatpush.msra.mxu0 %v309
  %453 = vmatpush.msra.mxu0 %v307
  %454 = vmatpush.msra.mxu0 %v305
  %455 = vmatpush.msra.mxu0 %v303
  %456 = vmatmul.f32.gmra.mxu0 %v376
  %v457 = vpop.f32.mrf.mxu0
  %v458 = vadd.f32 %v337, %v457
  %459 = vmatmul.f32.gmra.mxu0 %v379
  %v460 = vpop.f32.mrf.mxu0
  %v461 = vadd.f32 %v342, %v460
  %462 = vmatmul.f32.gmra.mxu0 %v382
  %v463 = vpop.f32.mrf.mxu0
  %v464 = vadd.f32 %v347, %v463
  %465 = vmatmul.f32.gmra.mxu0 %v385
  %v466 = vpop.f32.mrf.mxu0
  %v467 = vadd.f32 %v352, %v466
  %468 = vmatmul.f32.gmra.mxu0 %v388
  %v469 = vpop.f32.mrf.mxu0
  %v470 = vadd.f32 %v357, %v469
  %471 = vmatmul.f32.gmra.mxu0 %v391
  %v472 = vpop.f32.mrf.mxu0
  %v473 = vadd.f32 %v362, %v472
  %474 = vmatmul.f32.gmra.mxu0 %v394
  %v475 = vpop.f32.mrf.mxu0
  %v476 = vadd.f32 %v367, %v475
  %477 = vmatmul.f32.gmra.mxu0 %v397
  %v478 = vpop.f32.mrf.mxu0
  %v479 = vadd.f32 %v372, %v478
  %480 = vdwg.mxu0
  %v481 = vtanh.pop %v417
  %v482 = vtanh.pop %v458
  %v483 = vtanh.pop %v420
  %v484 = vtanh.pop %v461
  %v485 = vtanh.pop %v423
  %v486 = vtanh.pop %v464
  %v487 = vtanh.pop %v426
  %v488 = vtanh.pop %v467
  %v489 = vtanh.pop %v429
  %v490 = vtanh.pop %v470
  %v491 = vtanh.pop %v432
  %v492 = vtanh.pop %v473
  %v493 = vtanh.pop %v435
  %v494 = vtanh.pop %v476
  %v495 = vtanh.pop %v438
  %v496 = vtanh.pop %v479
  %v497 = vld [vmem:[%s5] sm:$0x3]
  %v498 = vld [vmem:[%s6] sm:$0x3]
  %500 = vset.pattern.permute.xlu0 0
  %501 = vperm.xlu0 %500, %v498
  %v502 = vpop.permute.xlu0 %501
  %v505 = vsel %vm374, %v497, 0
  %507 = vmatpush.msra.mxu0 0.0
  %508 = vmatpush.msra.mxu0 0.0
  %509 = vmatpush.msra.mxu0 0.0
  %510 = vmatpush.msra.mxu0 0.0
  %511 = vmatpush.msra.mxu0 0.0
  %512 = vmatpush.msra.mxu0 0.0
  %513 = vmatpush.msra.mxu0 0.0
  %514 = vmatpush.msra.mxu0 0.0
  %515 = vmatpush.msra.mxu0 %v495
  %516 = vmatpush.msra.mxu0 %v493
  %517 = vmatpush.msra.mxu0 %v491
  %518 = vmatpush.msra.mxu0 %v489
  %519 = vmatpush.msra.mxu0 %v487
  %520 = vmatpush.msra.mxu0 %v485
  %521 = vmatpush.msra.mxu0 %v483
  %522 = vmatpush.msra.mxu0 %v481
  %523 = vmatmul.f32.gmra.mxu0 %v505
  %v524 = vpop.f32.mrf.mxu0
  %v525 = vadd.f32 %v502, %v524
  %526 = vdwg.mxu0
  %527 = vmatpush.msra.mxu0 0.0
  %528 = vmatpush.msra.mxu0 0.0
  %529 = vmatpush.msra.mxu0 0.0
  %530 = vmatpush.msra.mxu0 0.0
  %531 = vmatpush.msra.mxu0 0.0
  %532 = vmatpush.msra.mxu0 0.0
  %533 = vmatpush.msra.mxu0 0.0
  %534 = vmatpush.msra.mxu0 0.0
  %535 = vmatpush.msra.mxu0 %v496
  %536 = vmatpush.msra.mxu0 %v494
  %537 = vmatpush.msra.mxu0 %v492
  %538 = vmatpush.msra.mxu0 %v490
  %539 = vmatpush.msra.mxu0 %v488
  %540 = vmatpush.msra.mxu0 %v486
  %541 = vmatpush.msra.mxu0 %v484
  %542 = vmatpush.msra.mxu0 %v482
  %543 = vmatmul.f32.gmra.mxu0 %v505
  %v544 = vpop.f32.mrf.mxu0
  %v545 = vadd.f32 %v502, %v544
  %546 = vdwg.mxu0
  %v549 = vrot.slane %v545, 6
  %vm550 = vcmask 1041408
  %v551 = vsel %vm550, %v525, %v549
  %553 = vst [vmem:[%s7] sm:$0xf] %v551
  // Predicated region
  $region30: #{fcn_forward.1} parent=0 // pred_check
    _
  $region31: #{fcn_forward.1} parent=0 // pred_check_branch
    %555 = sbr.rel (0) target = $region33
  $region32: #{fcn_forward.1} parent=0 // pred_region
    _
  $region33: #{fcn_forward.1} parent=0 // pred_fallthru
    _
  // Predicated region
  $region34: #{fcn_forward.1} parent=0 // pred_check
    _
  $region35: #{fcn_forward.1} parent=0 // pred_check_branch
    %557 = sbr.rel (0) target = $region37
  $region36: #{fcn_forward.1} parent=0 // pred_region
    _
  $region37: #{fcn_forward.1} parent=0 // pred_fallthru
    _

</llo_original>
